<compile_context>
chip_gen: v7x
topology: tpu7x:2x2x1
jax: 0.10.0
libtpu: 0.0.40
codegen_flags: <defaults>
</compile_context>

<pallas_src>
import math
import numpy as np
import jax
import jax.numpy as jnp
from jax import lax
from jax.experimental import pallas as pl
from jax.experimental.pallas import tpu as pltpu

# ---------------- tiling constants ----------------
TN_ROWS = 512          # point-row tile of the projection matmul
TC = 256               # output-channel tile (lane-dense; feeds the 256-wide MXU on v6e/v7x)
TM_SEG = 128           # segments (clusters) handled per grid step of the segment-max kernel
HALF_SEG = TM_SEG // 2
ROW_CHUNK = 16         # bf16 sublane tile height (bf16 vreg tile is (16, 128))
SEG_STORE = 8          # segments whose results are batched into one aligned 8-sublane store
MAX_UNROLL_CHUNKS = 8  # unroll bound for the per-segment chunk loop
NEG_INF = float("-inf")


def _round_up(x, m):
    return ((x + m - 1) // m) * m


def _vmem_limit_bytes(requested):
    """Scoped-VMEM request capped below the chip's physical capacity (v7x: 64 MiB/TC)."""
    try:
        cap = pltpu.get_tpu_info().vmem_capacity_bytes
    except Exception:
        cap = 64 * 1024 * 1024
    return int(min(max(requested, 8 * 1024 * 1024), cap * 3 // 4))


# ---------------- kernel 1: projection matmul (feat @ W + b), bf16 in / f32 acc ----------------
def _proj_kernel(x_ref, w_ref, b_ref, o_ref):
    acc = jnp.dot(x_ref[...], w_ref[...], preferred_element_type=jnp.float32)
    o_ref[...] = (acc + b_ref[...]).astype(o_ref.dtype)


def linear_project(feat, weight, bias, n_pad, c_pad):
    """feat [N, C_in] @ weight [C_in, C_out] + bias -> proj [n_pad, c_pad] bfloat16.
    NOTE: padded rows (>= N) hold the bias value (not zeros) and padded channels hold
    the zero-padded bias — downstream consumers must mask by row / channel range."""
    N, C_in = feat.shape
    C_out = weight.shape[1]

    f = jnp.zeros((n_pad, C_in), jnp.bfloat16).at[:N, :].set(feat.astype(jnp.bfloat16))
    w = jnp.zeros((C_in, c_pad), jnp.bfloat16).at[:, :C_out].set(weight.astype(jnp.bfloat16))
    b = jnp.zeros((1, c_pad), jnp.float32).at[:, :C_out].set(
        bias.reshape(1, -1).astype(jnp.float32))

    # C_in (K) is small -> no K padding in HBM and no reduction grid axis: fully parallel grid.
    return pl.pallas_call(
        _proj_kernel,
        out_shape=jax.ShapeDtypeStruct((n_pad, c_pad), jnp.bfloat16),
        grid_spec=pltpu.PrefetchScalarGridSpec(
            num_scalar_prefetch=0,
            grid=(n_pad // TN_ROWS, c_pad // TC),
            in_specs=[
                pl.BlockSpec((TN_ROWS, C_in), lambda i, j: (i, 0)),
                pl.BlockSpec((C_in, TC), lambda i, j: (0, j)),
                pl.BlockSpec((1, TC), lambda i, j: (0, j)),
            ],
            out_specs=pl.BlockSpec((TN_ROWS, TC), lambda i, j: (i, j)),
        ),
        compiler_params=pltpu.CompilerParams(
            dimension_semantics=("parallel", "parallel")),
    )(f, w, b)


# ---------------- kernel 2: windowed segment max (segment_csr reduce='max') ----------------
def _make_segmax_kernel(half_chunks, seg_chunks):
    rc = ROW_CHUNK

    def kernel(ptr_ref, proj_hbm, out_ref, buf0, buf1, sem):
        s = pl.program_id(0)
        c_pad = out_ref.shape[1]
        row_iota = lax.broadcasted_iota(jnp.int32, (rc, 1), 0)          # hoisted constants
        acc_init = jnp.full((rc, c_pad), NEG_INF, dtype=jnp.float32)

        def start_fetch(seg0, buf, slot):
            # window of `half_chunks` aligned 16-row chunks starting at this half-group's
            # first segment (ptr is scalar-prefetched into SMEM).
            cp = pltpu.make_async_copy(
                proj_hbm.at[pl.ds(ptr_ref[seg0] // rc, half_chunks)],
                buf, sem.at[slot])
            cp.start()
            return cp

        def seg_row_max(start, end, base_chunk, buf):
            first = start // rc - base_chunk            # window-local first chunk of segment

            def one_chunk(t, acc):
                lc = jnp.minimum(first + t, half_chunks - 1)   # stay inside the window
                rows = buf[lc].astype(jnp.float32)             # (rc, c_pad)
                gidx = (base_chunk + lc) * rc + row_iota       # global row ids (rc, 1)
                ok = (gidx >= start) & (gidx < end)            # max is idempotent -> clamping OK
                return jnp.maximum(acc, jnp.where(ok, rows, NEG_INF))

            if seg_chunks <= MAX_UNROLL_CHUNKS:
                acc = acc_init
                for t in range(seg_chunks):                    # static unroll (typical: 1-2)
                    acc = one_chunk(t, acc)
            else:                                              # pathological segment sizes
                acc = lax.fori_loop(0, seg_chunks, one_chunk, acc_init)
            return jnp.max(acc, axis=0, keepdims=True)         # (1, c_pad)

        def process_half(h, buf):
            seg0 = s * TM_SEG + h * HALF_SEG
            base_chunk = ptr_ref[seg0] // rc

            @pl.loop(0, HALF_SEG // SEG_STORE)
            def _(g):
                rows = []
                for r in range(SEG_STORE):                     # static unroll: 8 segments
                    sid = seg0 + g * SEG_STORE + r
                    rows.append(seg_row_max(ptr_ref[sid], ptr_ref[sid + 1],
                                            base_chunk, buf))
                off = pl.multiple_of(h * HALF_SEG + g * SEG_STORE, SEG_STORE)
                # batched, aligned 8-sublane store instead of 8 single-row masked stores
                out_ref[pl.ds(off, SEG_STORE), :] = jnp.concatenate(
                    rows, axis=0).astype(out_ref.dtype)

        # Two half-group windows: cp1 overlaps the first half's compute.
        cp0 = start_fetch(s * TM_SEG, buf0, 0)
        cp1 = start_fetch(s * TM_SEG + HALF_SEG, buf1, 1)
        cp0.wait()
        process_half(0, buf0)
        cp1.wait()
        process_half(1, buf1)
        # TODO(synk): cross-grid-step window prefetch would also hide cp0's latency,
        # but needs megacore-aware buffer priming; per-step priming is kept for safety.

    return kernel


def segment_max_csr(proj_pad, ptr_padded, num_segments, c_out, half_chunks, seg_chunks):
    """proj_pad [n_pad, c_pad] bf16 (rows sorted by segment), ptr_padded int32 [m_pad+1]
    monotone with values in [0, N].  Returns [num_segments, c_out] float32 per-segment max."""
    n_pad, c_pad = proj_pad.shape
    n_chunks = n_pad // ROW_CHUNK
    m_pad = ptr_padded.shape[0] - 1
    assert m_pad % TM_SEG == 0

    proj3 = proj_pad.reshape(n_chunks, ROW_CHUNK, c_pad)   # chunked view for windowed DMA
    ptr = jnp.asarray(ptr_padded, dtype=jnp.int32)

    buf_bytes = half_chunks * ROW_CHUNK * c_pad * 2
    out_bytes = TM_SEG * c_pad * 4
    vmem_req = 2 * buf_bytes + 2 * out_bytes + (2 << 20)

    out = pl.pallas_call(
        _make_segmax_kernel(half_chunks, seg_chunks),
        out_shape=jax.ShapeDtypeStruct((m_pad, c_pad), jnp.float32),
        grid_spec=pltpu.PrefetchScalarGridSpec(
            num_scalar_prefetch=1,                         # idx_ptr -> SMEM
            grid=(m_pad // TM_SEG,),
            in_specs=[pl.BlockSpec(memory_space=pl.ANY)],  # proj stays in HBM; manual windows
            out_specs=pl.BlockSpec((TM_SEG, c_pad), lambda s, ptr_ref: (s, 0)),
            scratch_shapes=[
                pltpu.VMEM((half_chunks, ROW_CHUNK, c_pad), jnp.bfloat16),
                pltpu.VMEM((half_chunks, ROW_CHUNK, c_pad), jnp.bfloat16),
                pltpu.SemaphoreType.DMA((2,)),
            ],
        ),
        compiler_params=pltpu.CompilerParams(
            dimension_semantics=("parallel",),             # windows primed per-step -> megacore-safe
            vmem_limit_bytes=_vmem_limit_bytes(vmem_req)),
    )(ptr, proj3)
    # padded (empty) segments produce -inf rows; they are removed by this slice.
    return out[:num_segments, :c_out]


def pooled_projection(feat_sorted, weight, bias, idx_ptr):
    """Fused SerializedPooling feature path:
         segment_csr(feat_sorted @ W + b, idx_ptr, reduce='max')
       feat_sorted [N, C_in] is already permuted into segment order,
       idx_ptr [M+1] (sorted, idx_ptr[-1] == N).  Returns [M, C_out] float32."""
    N = int(feat_sorted.shape[0])
    C_out = int(weight.shape[1])
    ptr = np.asarray(idx_ptr, dtype=np.int64)
    M = int(ptr.shape[0]) - 1

    m_pad = _round_up(max(M, 1), TM_SEG)
    ptr_full = np.full((m_pad + 1,), N, dtype=np.int32)
    ptr_full[: M + 1] = ptr.astype(np.int32)

    rc = ROW_CHUNK
    # host-known static bounds for the windowed segment-max kernel
    half_starts = ptr_full[0:m_pad:HALF_SEG].astype(np.int64)
    half_ends = ptr_full[HALF_SEG:m_pad + 1:HALF_SEG].astype(np.int64)
    half_chunks = int(max(1, np.max((half_ends + rc - 1) // rc - half_starts // rc)))
    p64 = ptr_full.astype(np.int64)
    seg_chunks = int(max(1, np.max((p64[1:] + rc - 1) // rc - p64[:-1] // rc)))
    # TODO(synk): if counts.max() is pathologically large, half_chunks may exceed VMEM;
    # in that regime the window itself (and the channel dim) should be tiled as well.

    c_pad = _round_up(max(C_out, 1), TC)
    min_rows = (N // rc + half_chunks) * rc        # every DMA window must stay in-bounds
    n_pad = _round_up(max(N, min_rows, 1), TN_ROWS)

    proj_pad = linear_project(feat_sorted, weight, bias, n_pad, c_pad)
    return segment_max_csr(proj_pad, ptr_full, M, C_out, half_chunks, seg_chunks)


# ---------------- module wrapper ----------------
class SerializedPoolingJAX:
    def __init__(self, in_channels, out_channels, stride=2, reduce='max',
                 shuffle_orders=True, traceable=True, key=None):
        assert stride == 2 ** (math.ceil(stride) - 1).bit_length()
        assert reduce == 'max', "kernel implements the default reduce='max'"
        self.in_channels = in_channels
        self.out_channels = out_channels
        self.stride = stride
        self.reduce = reduce
        self.shuffle_orders = shuffle_orders
        self.traceable = traceable
        # deterministic init of nn.Linear(in_channels, out_channels)
        kw, kb = jax.random.split(key)
        bound = 1.0 / math.sqrt(in_channels)
        self.weight = jax.random.uniform(kw, (in_channels, out_channels),
                                         jnp.float32, -bound, bound)
        self.bias = jax.random.uniform(kb, (1, out_channels),
                                       jnp.float32, -bound, bound)

    def __call__(self, point, shuffle_key):
        pooling_depth = (math.ceil(self.stride) - 1).bit_length()
        if pooling_depth > point['serialized_depth']:
            pooling_depth = 0
        assert {'serialized_code', 'serialized_order',
                'serialized_inverse', 'serialized_depth'}.issubset(point.keys())

        # ---- host-side serialization bookkeeping (data-dependent shapes) ----
        code = np.asarray(point['serialized_code']) >> (pooling_depth * 3)
        code_, cluster, counts = np.unique(code[0], return_inverse=True, return_counts=True)
        indices = np.argsort(cluster, kind='stable')
        idx_ptr = np.concatenate([np.zeros(1, dtype=np.int64), np.cumsum(counts)])
        head_indices = indices[idx_ptr[:-1]]
        code = code[:, head_indices]
        order = np.argsort(code, axis=1, kind='stable')
        inverse = np.zeros_like(order)
        np.put_along_axis(inverse, order,
                          np.broadcast_to(np.arange(code.shape[1]), code.shape), axis=1)
        if self.shuffle_orders:
            perm = np.asarray(jax.random.permutation(shuffle_key, code.shape[0]))
            code, order, inverse = code[perm], order[perm], inverse[perm]

        num_segments = int(code_.shape[0])

        # ---- Pallas hot path: bf16 tiled projection + windowed segment max ----
        feat_sorted = jnp.asarray(point['feat'])[indices]
        coord_sorted = jnp.asarray(point['coord'])[indices]

        pooled_feat = pooled_projection(feat_sorted, self.weight, self.bias, idx_ptr)

        # coord mean: last dim = 3 is lane-sparse and negligible FLOPs -> plain JAX.
        seg_ids = jnp.asarray(cluster[indices].astype(np.int32))
        pooled_coord = (jax.ops.segment_sum(coord_sorted, seg_ids,
                                            num_segments=num_segments)
                        / jnp.asarray(counts.astype(np.float32))[:, None])

        point_dict = dict(
            feat=pooled_feat,
            coord=pooled_coord,
            grid_coord=jnp.asarray(point['grid_coord'])[head_indices] >> pooling_depth,
            serialized_code=jnp.asarray(code),
            serialized_order=jnp.asarray(order),
            serialized_inverse=jnp.asarray(inverse),
            serialized_depth=point['serialized_depth'] - pooling_depth,
            batch=jnp.asarray(point['batch'])[head_indices],
        )
        if 'condition' in point:
            point_dict['condition'] = point['condition']
        if 'context' in point:
            point_dict['context'] = point['context']
        if self.traceable:
            point_dict['pooling_inverse'] = jnp.asarray(cluster)
            point_dict['pooling_parent'] = point
        # norm_layer / act_layer default to None in the module -> identity here.
        # TODO(synk): point.sparsify() (spconv sparse-tensor construction) has no Pallas equivalent.
        return point_dict


if __name__ == "__main__":
    key = jax.random.PRNGKey(0)
    k_feat, k_coord, k_code, k_params, k_shuffle = jax.random.split(key, 5)

    N, C_in, C_out = 64, 16, 32
    num_orders, serialized_depth = 2, 3

    feat = jax.random.normal(k_feat, (N, C_in), jnp.float32)
    coord = jax.random.uniform(k_coord, (N, 3), jnp.float32) * 8.0
    grid_coord = jnp.floor(coord).astype(jnp.int32)
    codes = jax.random.randint(k_code, (num_orders, N), 0,
                               2 ** (3 * serialized_depth), dtype=jnp.int32)
    order_np = np.argsort(np.asarray(codes), axis=1, kind='stable')
    inverse_np = np.zeros_like(order_np)
    np.put_along_axis(inverse_np, order_np,
                      np.broadcast_to(np.arange(N), order_np.shape), axis=1)

    point = dict(
        feat=feat, coord=coord, grid_coord=grid_coord, batch=jnp.zeros((N,), jnp.int32),
        serialized_code=codes, serialized_order=jnp.asarray(order_np),
        serialized_inverse=jnp.asarray(inverse_np), serialized_depth=serialized_depth,
    )

    module = SerializedPoolingJAX(C_in, C_out, stride=2, reduce='max',
                                  shuffle_orders=True, traceable=True, key=k_params)
    out = module(point, shuffle_key=k_shuffle)
    jax.block_until_ready(out['feat'])
    jax.block_until_ready(out['coord'])

    # ---- reference check (bf16-matched numerics for the projection) ----
    code0 = np.asarray(codes)[0] >> 3
    _, cluster, counts = np.unique(code0, return_inverse=True, return_counts=True)
    indices = np.argsort(cluster, kind='stable')
    seg = jnp.asarray(cluster[indices].astype(np.int32))
    M = counts.shape[0]
    proj_ref = (jnp.dot(feat[indices].astype(jnp.bfloat16),
                        module.weight.astype(jnp.bfloat16),
                        preferred_element_type=jnp.float32)
                + module.bias).astype(jnp.bfloat16).astype(jnp.float32)
    ref_feat = jax.ops.segment_max(proj_ref, seg, num_segments=M)
    ref_coord = (jax.ops.segment_sum(coord[indices], seg, num_segments=M)
                 / jnp.asarray(counts.astype(np.float32))[:, None])

    assert out['feat'].shape == (M, C_out) and out['coord'].shape == (M, 3)
    np.testing.assert_allclose(np.asarray(out['feat']), np.asarray(ref_feat),
                               rtol=1e-2, atol=1e-2)
    np.testing.assert_allclose(np.asarray(out['coord']), np.asarray(ref_coord),
                               rtol=1e-3, atol=1e-3)
    print("KERNEL_OK")
</pallas_src>

<mosaic_0001>
module attributes {stable_mosaic.version = 11 : i64} {
  func.func @_proj_kernel(%arg0: i32, %arg1: i32, %arg2: memref<512x16xbf16, #tpu.memory_space<vmem>>, %arg3: memref<16x256xbf16, #tpu.memory_space<vmem>>, %arg4: memref<1x256xf32, #tpu.memory_space<vmem>>, %arg5: memref<512x256xbf16, #tpu.memory_space<vmem>>) attributes {dimension_semantics = [#tpu.dimension_semantics<parallel>, #tpu.dimension_semantics<parallel>], iteration_bounds = array<i64: 1, 1>, scalar_prefetch = 0 : i64, scratch_operands = 0 : i64, tpu.core_type = #tpu.core_type<tc>, window_params = [{transform_indices = @transform_0, window_bounds = array<i64: 512, 16>}, {transform_indices = @transform_1, window_bounds = array<i64: 16, 256>}, {transform_indices = @transform_2, window_bounds = array<i64: 1, 256>}, {transform_indices = @transform_3, window_bounds = array<i64: 512, 256>}]} {
    %c0 = arith.constant 0 : index
    %c0_0 = arith.constant 0 : index
    %0 = vector.load %arg2[%c0, %c0_0] : memref<512x16xbf16, #tpu.memory_space<vmem>>, vector<512x16xbf16>
    %c0_1 = arith.constant 0 : index
    %c0_2 = arith.constant 0 : index
    %1 = vector.load %arg3[%c0_1, %c0_2] : memref<16x256xbf16, #tpu.memory_space<vmem>>, vector<16x256xbf16>
    %cst = arith.constant dense<0.000000e+00> : vector<512x256xf32>
    %2 = tpu.matmul %0, %1, %cst {dimension_numbers = #tpu.dot_dimension_numbers<[1], [0], [0], [1], [0, 0, 1, 1], [], []>} : vector<512x16xbf16>, vector<16x256xbf16>, vector<512x256xf32> -> vector<512x256xf32>
    %c0_3 = arith.constant 0 : index
    %c0_4 = arith.constant 0 : index
    %3 = vector.load %arg4[%c0_3, %c0_4] : memref<1x256xf32, #tpu.memory_space<vmem>>, vector<1x256xf32>
    %4 = vector.broadcast %3 : vector<1x256xf32> to vector<512x256xf32>
    %5 = arith.addf %2, %4 : vector<512x256xf32>
    %6 = arith.truncf %5 : vector<512x256xf32> to vector<512x256xbf16>
    %c0_5 = arith.constant 0 : index
    %c0_6 = arith.constant 0 : index
    %7 = vector.load %arg5[%c0_5, %c0_6] : memref<512x256xbf16, #tpu.memory_space<vmem>>, vector<512x256xbf16>
    tpu.vector_store %arg5[%c0_5, %c0_6], %6 {strides = array<i32>} : memref<512x256xbf16, #tpu.memory_space<vmem>>, vector<512x256xbf16>,
    return
  }
  func.func @transform_0(%arg0: i32, %arg1: i32) -> (i32, i32) {
    %c0_i32 = arith.constant 0 : i32
    %c0_i32_0 = arith.constant 0 : i32
    return %arg0, %c0_i32 : i32, i32
  }
  func.func @transform_1(%arg0: i32, %arg1: i32) -> (i32, i32) {
    %c0_i32 = arith.constant 0 : i32
    %c0_i32_0 = arith.constant 0 : i32
    return %c0_i32, %arg1 : i32, i32
  }
  func.func @transform_2(%arg0: i32, %arg1: i32) -> (i32, i32) {
    %c0_i32 = arith.constant 0 : i32
    %c0_i32_0 = arith.constant 0 : i32
    return %c0_i32, %arg1 : i32, i32
  }
  func.func @transform_3(%arg0: i32, %arg1: i32) -> (i32, i32) {
    %c0_i32 = arith.constant 0 : i32
    return %arg0, %arg1 : i32, i32
  }
}

</mosaic_0001>

<llo_original>
// kernel: tpu_custom_call.1
$region0: #{tpu_custom_call.1}
  #allocation0 [shape = 'u32[]', space=smem, size = 0x4, offset = 0x4, fixed_abs, tag = 'smem constant byte address 0x4 - core index']
  #allocation1 [shape = 'u32[144,128]{1,0:T(1,128)}', space=vmem, size = 0x12000, scoped, tag = 'internal scratch']
  %s0 = inlined_call_operand.vmem [shape: bf16[512,16], index: 0, kind: input, shape index: {}]
  %s1 = inlined_call_operand.vmem [shape: bf16[16,256], index: 1, kind: input, shape index: {}]
  %s2 = inlined_call_operand.vmem [shape: f32[1,256], index: 2, kind: input, shape index: {}]
  %s3 = inlined_call_operand.hbm [shape: bf16[512,256], index: 3, kind: output, shape index: {}]
  %s4 = sld [smem:[#allocation0]]
  $region22: #{tpu_custom_call.1} parent=0
    _
  %s6 = ssub.s32 1, %s4
  %s7 = scalar_select 0, %s6, %s4
  $region1: #{tpu_custom_call.1} parent=0
    #allocation2 [shape = 'u8[262144]{0}', space=vmem, size = 0x40000, scoped, tag = 'output window, operand 0, single buffered']
    #allocation3 [shape = 's32[1]{0}', space=sflag, size = 0x4, scoped, tag = 'scoped memory for tpu_custom_call.1']
    %8 = vsyncpa [#allocation3], 0
    // Predicated region
    $region2: #{tpu_custom_call.1} parent=1 // pred_check
      _
    $region3: #{tpu_custom_call.1} parent=1 // pred_check_branch
      %10 = sbr.rel (0) target = $region5
    $region4: #{tpu_custom_call.1} parent=1 // pred_region
      _
    $region5: #{tpu_custom_call.1} parent=1 // pred_fallthru
      _
    // Predicated region
    $region6: #{tpu_custom_call.1} parent=1 // pred_check
      _
    $region7: #{tpu_custom_call.1} parent=1 // pred_check_branch
      %12 = sbr.rel (0) target = $region9
    $region8: #{tpu_custom_call.1} parent=1 // pred_region
      _
    $region9: #{tpu_custom_call.1} parent=1 // pred_fallthru
      _
    // Predicated region
    $region10: #{tpu_custom_call.1} parent=1 // pred_check
      _
    $region11: #{tpu_custom_call.1} parent=1 // pred_check_branch
      %14 = sbr.rel (0) target = $region13
    $region12: #{tpu_custom_call.1} parent=1 // pred_region
      _
    $region13: #{tpu_custom_call.1} parent=1 // pred_fallthru
      _
    %v16 = vld [vmem:[%s0] sm:$0xf]
    %v17 = vld [vmem:[%s0 + $0x4] sm:$0xf]
    %v18 = vld [vmem:[%s0 + $0x8] sm:$0xf]
    %v19 = vld [vmem:[%s0 + $0xc] sm:$0xf]
    %v20 = vld [vmem:[%s0 + $0x10] sm:$0xf]
    %v21 = vld [vmem:[%s0 + $0x14] sm:$0xf]
    %v22 = vld [vmem:[%s0 + $0x18] sm:$0xf]
    %v23 = vld [vmem:[%s0 + $0x1c] sm:$0xf]
    %v24 = vld [vmem:[%s0 + $0x20] sm:$0xf]
    %v25 = vld [vmem:[%s0 + $0x24] sm:$0xf]
    %v26 = vld [vmem:[%s0 + $0x28] sm:$0xf]
    %v27 = vld [vmem:[%s0 + $0x2c] sm:$0xf]
    %v28 = vld [vmem:[%s0 + $0x30] sm:$0xf]
    %v29 = vld [vmem:[%s0 + $0x34] sm:$0xf]
    %v30 = vld [vmem:[%s0 + $0x38] sm:$0xf]
    %v31 = vld [vmem:[%s0 + $0x3c] sm:$0xf]
    %v32 = vld [vmem:[%s0 + $0x40] sm:$0xf]
    %v33 = vld [vmem:[%s0 + $0x44] sm:$0xf]
    %v34 = vld [vmem:[%s0 + $0x48] sm:$0xf]
    %v35 = vld [vmem:[%s0 + $0x4c] sm:$0xf]
    %v36 = vld [vmem:[%s0 + $0x50] sm:$0xf]
    %v37 = vld [vmem:[%s0 + $0x54] sm:$0xf]
    %v38 = vld [vmem:[%s0 + $0x58] sm:$0xf]
    %v39 = vld [vmem:[%s0 + $0x5c] sm:$0xf]
    %v40 = vld [vmem:[%s0 + $0x60] sm:$0xf]
    %v41 = vld [vmem:[%s0 + $0x64] sm:$0xf]
    %v42 = vld [vmem:[%s0 + $0x68] sm:$0xf]
    %v43 = vld [vmem:[%s0 + $0x6c] sm:$0xf]
    %v44 = vld [vmem:[%s0 + $0x70] sm:$0xf]
    %v45 = vld [vmem:[%s0 + $0x74] sm:$0xf]
    %v46 = vld [vmem:[%s0 + $0x78] sm:$0xf]
    %v47 = vld [vmem:[%s0 + $0x7c] sm:$0xf]
    %v48 = vld [vmem:[%s0 + $0x80] sm:$0xf]
    %v49 = vld [vmem:[%s0 + $0x84] sm:$0xf]
    %v50 = vld [vmem:[%s0 + $0x88] sm:$0xf]
    %v51 = vld [vmem:[%s0 + $0x8c] sm:$0xf]
    %v52 = vld [vmem:[%s0 + $0x90] sm:$0xf]
    %v53 = vld [vmem:[%s0 + $0x94] sm:$0xf]
    %v54 = vld [vmem:[%s0 + $0x98] sm:$0xf]
    %v55 = vld [vmem:[%s0 + $0x9c] sm:$0xf]
    %v56 = vld [vmem:[%s0 + $0xa0] sm:$0xf]
    %v57 = vld [vmem:[%s0 + $0xa4] sm:$0xf]
    %v58 = vld [vmem:[%s0 + $0xa8] sm:$0xf]
    %v59 = vld [vmem:[%s0 + $0xac] sm:$0xf]
    %v60 = vld [vmem:[%s0 + $0xb0] sm:$0xf]
    %v61 = vld [vmem:[%s0 + $0xb4] sm:$0xf]
    %v62 = vld [vmem:[%s0 + $0xb8] sm:$0xf]
    %v63 = vld [vmem:[%s0 + $0xbc] sm:$0xf]
    %v64 = vld [vmem:[%s0 + $0xc0] sm:$0xf]
    %v65 = vld [vmem:[%s0 + $0xc4] sm:$0xf]
    %v66 = vld [vmem:[%s0 + $0xc8] sm:$0xf]
    %v67 = vld [vmem:[%s0 + $0xcc] sm:$0xf]
    %v68 = vld [vmem:[%s0 + $0xd0] sm:$0xf]
    %v69 = vld [vmem:[%s0 + $0xd4] sm:$0xf]
    %v70 = vld [vmem:[%s0 + $0xd8] sm:$0xf]
    %v71 = vld [vmem:[%s0 + $0xdc] sm:$0xf]
    %v72 = vld [vmem:[%s0 + $0xe0] sm:$0xf]
    %v73 = vld [vmem:[%s0 + $0xe4] sm:$0xf]
    %v74 = vld [vmem:[%s0 + $0xe8] sm:$0xf]
    %v75 = vld [vmem:[%s0 + $0xec] sm:$0xf]
    %v76 = vld [vmem:[%s0 + $0xf0] sm:$0xf]
    %v77 = vld [vmem:[%s0 + $0xf4] sm:$0xf]
    %v78 = vld [vmem:[%s0 + $0xf8] sm:$0xf]
    %v79 = vld [vmem:[%s0 + $0xfc] sm:$0xf]
    %v80 = vld [vmem:[%s1] sm:$0xff]
    %v81 = vld [vmem:[%s1 + $0x8] sm:$0xff]
    %v82 = vld [vmem:[%s2] sm:$0x3]
    %v84 = vlaneseq
    %v85 = vshrl.u32 %v84, 7
    %v86 = vsub.s32 0, %v85
    %v87 = vrot.slane %v82, %v86
    %v88 = vlaneseq
    %v89 = vshrl.u32 %v88, 7
    %v90 = vsub.s32 1, %v89
    %v91 = vrot.slane %v82, %v90
    %v158 = vunpack.c.l.b16 %v16
    %v159 = vunpack.c.l.b16 %v17
    %v160 = vunpack.c.l.b16 %v18
    %v161 = vunpack.c.l.b16 %v19
    %v162 = vunpack.c.l.b16 %v20
    %v163 = vunpack.c.l.b16 %v21
    %v164 = vunpack.c.l.b16 %v22
    %v165 = vunpack.c.l.b16 %v23
    %v166 = vunpack.c.l.b16 %v24
    %v167 = vunpack.c.l.b16 %v25
    %v168 = vunpack.c.l.b16 %v26
    %v169 = vunpack.c.l.b16 %v27
    %v170 = vunpack.c.l.b16 %v28
    %v171 = vunpack.c.l.b16 %v29
    %v172 = vunpack.c.l.b16 %v30
    %v173 = vunpack.c.l.b16 %v31
    %v174 = vunpack.c.l.b16 %v32
    %v175 = vunpack.c.l.b16 %v33
    %v176 = vunpack.c.l.b16 %v34
    %v177 = vunpack.c.l.b16 %v35
    %v178 = vunpack.c.l.b16 %v36
    %v179 = vunpack.c.l.b16 %v37
    %v180 = vunpack.c.l.b16 %v38
    %v181 = vunpack.c.l.b16 %v39
    %v182 = vunpack.c.l.b16 %v40
    %v183 = vunpack.c.l.b16 %v41
    %v184 = vunpack.c.l.b16 %v42
    %v185 = vunpack.c.l.b16 %v43
    %v186 = vunpack.c.l.b16 %v44
    %v187 = vunpack.c.l.b16 %v45
    %v188 = vunpack.c.l.b16 %v46
    %v189 = vunpack.c.l.b16 %v47
    %v190 = vunpack.c.l.b16 %v48
    %v191 = vunpack.c.l.b16 %v49
    %v192 = vunpack.c.l.b16 %v50
    %v193 = vunpack.c.l.b16 %v51
    %v194 = vunpack.c.l.b16 %v52
    %v195 = vunpack.c.l.b16 %v53
    %v196 = vunpack.c.l.b16 %v54
    %v197 = vunpack.c.l.b16 %v55
    %v198 = vunpack.c.l.b16 %v56
    %v199 = vunpack.c.l.b16 %v57
    %v200 = vunpack.c.l.b16 %v58
    %v201 = vunpack.c.l.b16 %v59
    %v202 = vunpack.c.l.b16 %v60
    %v203 = vunpack.c.l.b16 %v61
    %v204 = vunpack.c.l.b16 %v62
    %v205 = vunpack.c.l.b16 %v63
    %v206 = vunpack.c.l.b16 %v64
    %v207 = vunpack.c.l.b16 %v65
    %v208 = vunpack.c.l.b16 %v66
    %v209 = vunpack.c.l.b16 %v67
    %v210 = vunpack.c.l.b16 %v68
    %v211 = vunpack.c.l.b16 %v69
    %v212 = vunpack.c.l.b16 %v70
    %v213 = vunpack.c.l.b16 %v71
    %v214 = vunpack.c.l.b16 %v72
    %v215 = vunpack.c.l.b16 %v73
    %v216 = vunpack.c.l.b16 %v74
    %v217 = vunpack.c.l.b16 %v75
    %v218 = vunpack.c.l.b16 %v76
    %v219 = vunpack.c.l.b16 %v77
    %v220 = vunpack.c.l.b16 %v78
    %v221 = vunpack.c.l.b16 %v79
    %v222 = vpack.c.b16 %v159, %v158
    %v223 = vpack.c.b16 %v161, %v160
    %v224 = vpack.c.b16 %v163, %v162
    %v225 = vpack.c.b16 %v165, %v164
    %v226 = vpack.c.b16 %v167, %v166
    %v227 = vpack.c.b16 %v169, %v168
    %v228 = vpack.c.b16 %v171, %v170
    %v229 = vpack.c.b16 %v173, %v172
    %v230 = vpack.c.b16 %v175, %v174
    %v231 = vpack.c.b16 %v177, %v176
    %v232 = vpack.c.b16 %v179, %v178
    %v233 = vpack.c.b16 %v181, %v180
    %v234 = vpack.c.b16 %v183, %v182
    %v235 = vpack.c.b16 %v185, %v184
    %v236 = vpack.c.b16 %v187, %v186
    %v237 = vpack.c.b16 %v189, %v188
    %v238 = vpack.c.b16 %v191, %v190
    %v239 = vpack.c.b16 %v193, %v192
    %v240 = vpack.c.b16 %v195, %v194
    %v241 = vpack.c.b16 %v197, %v196
    %v242 = vpack.c.b16 %v199, %v198
    %v243 = vpack.c.b16 %v201, %v200
    %v244 = vpack.c.b16 %v203, %v202
    %v245 = vpack.c.b16 %v205, %v204
    %v246 = vpack.c.b16 %v207, %v206
    %v247 = vpack.c.b16 %v209, %v208
    %v248 = vpack.c.b16 %v211, %v210
    %v249 = vpack.c.b16 %v213, %v212
    %v250 = vpack.c.b16 %v215, %v214
    %v251 = vpack.c.b16 %v217, %v216
    %v252 = vpack.c.b16 %v219, %v218
    %v253 = vpack.c.b16 %v221, %v220
    %v256 = vunpack.c.l.b16 %v80
    %v257 = vunpack.c.h.b16 %v80
    %v258 = vunpack.c.l.b16 %v81
    %v259 = vunpack.c.h.b16 %v81
    %v260 = vpack.c.b16 %v258, %v256
    %v261 = vpack.c.b16 %v259, %v257
    %vm264 = vcmask 130048
    %v266 = vsel %vm264, %v222, 0
    %v269 = vsel %vm264, %v223, 0
    %v272 = vsel %vm264, %v224, 0
    %v275 = vsel %vm264, %v225, 0
    %v278 = vsel %vm264, %v226, 0
    %v281 = vsel %vm264, %v227, 0
    %v284 = vsel %vm264, %v228, 0
    %v287 = vsel %vm264, %v229, 0
    %v290 = vsel %vm264, %v230, 0
    %v293 = vsel %vm264, %v231, 0
    %v296 = vsel %vm264, %v232, 0
    %v299 = vsel %vm264, %v233, 0
    %v302 = vsel %vm264, %v234, 0
    %v305 = vsel %vm264, %v235, 0
    %v308 = vsel %vm264, %v236, 0
    %v311 = vsel %vm264, %v237, 0
    %v314 = vsel %vm264, %v238, 0
    %v317 = vsel %vm264, %v239, 0
    %v320 = vsel %vm264, %v240, 0
    %v323 = vsel %vm264, %v241, 0
    %v326 = vsel %vm264, %v242, 0
    %v329 = vsel %vm264, %v243, 0
    %v332 = vsel %vm264, %v244, 0
    %v335 = vsel %vm264, %v245, 0
    %v338 = vsel %vm264, %v246, 0
    %v341 = vsel %vm264, %v247, 0
    %v344 = vsel %vm264, %v248, 0
    %v347 = vsel %vm264, %v249, 0
    %v350 = vsel %vm264, %v250, 0
    %v353 = vsel %vm264, %v251, 0
    %v356 = vsel %vm264, %v252, 0
    %v359 = vsel %vm264, %v253, 0
    %361 = vmatprep.subr.bf16.mxu0 %v261
    %362 = vmatpush1.bf16.msra.mxu0 %v260
    %363 = vmatprep.subr.bf16.mxu0 0
    %364 = vmatpush1.bf16.msra.mxu0 0
    %365 = vmatprep.subr.bf16.mxu0 0
    %366 = vmatpush1.bf16.msra.mxu0 0
    %367 = vmatprep.subr.bf16.mxu0 0
    %368 = vmatpush1.bf16.msra.mxu0 0
    %369 = vmatprep.subr.bf16.mxu0 0
    %370 = vmatpush1.bf16.msra.mxu0 0
    %371 = vmatprep.subr.bf16.mxu0 0
    %372 = vmatpush1.bf16.msra.mxu0 0
    %373 = vmatprep.subr.bf16.mxu0 0
    %374 = vmatpush1.bf16.msra.mxu0 0
    %375 = vmatprep.subr.bf16.mxu0 0
    %376 = vmatpush1.bf16.msra.mxu0 0
    %377 = vmatprep.subr.bf16.mxu0 0
    %378 = vmatpush1.bf16.msra.mxu0 0
    %379 = vmatprep.subr.bf16.mxu0 0
    %380 = vmatpush1.bf16.msra.mxu0 0
    %381 = vmatprep.subr.bf16.mxu0 0
    %382 = vmatpush1.bf16.msra.mxu0 0
    %383 = vmatprep.subr.bf16.mxu0 0
    %384 = vmatpush1.bf16.msra.mxu0 0
    %385 = vmatprep.subr.bf16.mxu0 0
    %386 = vmatpush1.bf16.msra.mxu0 0
    %387 = vmatprep.subr.bf16.mxu0 0
    %388 = vmatpush1.bf16.msra.mxu0 0
    %389 = vmatprep.subr.bf16.mxu0 0
    %390 = vmatpush1.bf16.msra.mxu0 0
    %391 = vmatprep.subr.bf16.mxu0 0
    %392 = vmatpush1.bf16.msra.mxu0 0
    %393 = vmatprep.mubr.bf16.mxu0 0
    %394 = vmatmul.mubr.bf16.gmra.mrb[0].mxu0 %v266
    %v395 = vpop.f32.mrb[0].mxu0
    %v396 = vadd.f32 %v87, %v395
    %v397 = vpop.f32.mrb[0].mxu0
    %v398 = vadd.f32 %v91, %v397
    %v399 = vpop.f32.mrb[0].mxu0
    %v400 = vadd.f32 %v87, %v399
    %v401 = vpop.f32.mrb[0].mxu0
    %v402 = vadd.f32 %v91, %v401
    %403 = vmatprep.mubr.bf16.mxu0 0
    %404 = vmatmul.mubr.bf16.gmra.mrb[0].mxu0 %v269
    %v405 = vpop.f32.mrb[0].mxu0
    %v406 = vadd.f32 %v87, %v405
    %v407 = vpop.f32.mrb[0].mxu0
    %v408 = vadd.f32 %v91, %v407
    %v409 = vpop.f32.mrb[0].mxu0
    %v410 = vadd.f32 %v87, %v409
    %v411 = vpop.f32.mrb[0].mxu0
    %v412 = vadd.f32 %v91, %v411
    %413 = vmatprep.mubr.bf16.mxu0 0
    %414 = vmatmul.mubr.bf16.gmra.mrb[0].mxu0 %v272
    %v415 = vpop.f32.mrb[0].mxu0
    %v416 = vadd.f32 %v87, %v415
    %v417 = vpop.f32.mrb[0].mxu0
    %v418 = vadd.f32 %v91, %v417
    %v419 = vpop.f32.mrb[0].mxu0
    %v420 = vadd.f32 %v87, %v419
    %v421 = vpop.f32.mrb[0].mxu0
    %v422 = vadd.f32 %v91, %v421
    %423 = vmatprep.mubr.bf16.mxu0 0
    %424 = vmatmul.mubr.bf16.gmra.mrb[0].mxu0 %v275
    %v425 = vpop.f32.mrb[0].mxu0
    %v426 = vadd.f32 %v87, %v425
    %v427 = vpop.f32.mrb[0].mxu0
    %v428 = vadd.f32 %v91, %v427
    %v429 = vpop.f32.mrb[0].mxu0
    %v430 = vadd.f32 %v87, %v429
    %v431 = vpop.f32.mrb[0].mxu0
    %v432 = vadd.f32 %v91, %v431
    %433 = vmatprep.mubr.bf16.mxu0 0
    %434 = vmatmul.mubr.bf16.gmra.mrb[0].mxu0 %v278
    %v435 = vpop.f32.mrb[0].mxu0
    %v436 = vadd.f32 %v87, %v435
    %v437 = vpop.f32.mrb[0].mxu0
    %v438 = vadd.f32 %v91, %v437
    %v439 = vpop.f32.mrb[0].mxu0
    %v440 = vadd.f32 %v87, %v439
    %v441 = vpop.f32.mrb[0].mxu0
    %v442 = vadd.f32 %v91, %v441
    %443 = vmatprep.mubr.bf16.mxu0 0
    %444 = vmatmul.mubr.bf16.gmra.mrb[0].mxu0 %v281
    %v445 = vpop.f32.mrb[0].mxu0
    %v446 = vadd.f32 %v87, %v445
    %v447 = vpop.f32.mrb[0].mxu0
    %v448 = vadd.f32 %v91, %v447
    %v449 = vpop.f32.mrb[0].mxu0
    %v450 = vadd.f32 %v87, %v449
    %v451 = vpop.f32.mrb[0].mxu0
    %v452 = vadd.f32 %v91, %v451
    %453 = vmatprep.mubr.bf16.mxu0 0
    %454 = vmatmul.mubr.bf16.gmra.mrb[0].mxu0 %v284
    %v455 = vpop.f32.mrb[0].mxu0
    %v456 = vadd.f32 %v87, %v455
    %v457 = vpop.f32.mrb[0].mxu0
    %v458 = vadd.f32 %v91, %v457
    %v459 = vpop.f32.mrb[0].mxu0
    %v460 = vadd.f32 %v87, %v459
    %v461 = vpop.f32.mrb[0].mxu0
    %v462 = vadd.f32 %v91, %v461
    %463 = vmatprep.mubr.bf16.mxu0 0
    %464 = vmatmul.mubr.bf16.gmra.mrb[0].mxu0 %v287
    %v465 = vpop.f32.mrb[0].mxu0
    %v466 = vadd.f32 %v87, %v465
    %v467 = vpop.f32.mrb[0].mxu0
    %v468 = vadd.f32 %v91, %v467
    %v469 = vpop.f32.mrb[0].mxu0
    %v470 = vadd.f32 %v87, %v469
    %v471 = vpop.f32.mrb[0].mxu0
    %v472 = vadd.f32 %v91, %v471
    %473 = vmatprep.mubr.bf16.mxu0 0
    %474 = vmatmul.mubr.bf16.gmra.mrb[0].mxu0 %v290
    %v475 = vpop.f32.mrb[0].mxu0
    %v476 = vadd.f32 %v87, %v475
    %v477 = vpop.f32.mrb[0].mxu0
    %v478 = vadd.f32 %v91, %v477
    %v479 = vpop.f32.mrb[0].mxu0
    %v480 = vadd.f32 %v87, %v479
    %v481 = vpop.f32.mrb[0].mxu0
    %v482 = vadd.f32 %v91, %v481
    %483 = vmatprep.mubr.bf16.mxu0 0
    %484 = vmatmul.mubr.bf16.gmra.mrb[0].mxu0 %v293
    %v485 = vpop.f32.mrb[0].mxu0
    %v486 = vadd.f32 %v87, %v485
    %v487 = vpop.f32.mrb[0].mxu0
    %v488 = vadd.f32 %v91, %v487
    %v489 = vpop.f32.mrb[0].mxu0
    %v490 = vadd.f32 %v87, %v489
    %v491 = vpop.f32.mrb[0].mxu0
    %v492 = vadd.f32 %v91, %v491
    %493 = vmatprep.mubr.bf16.mxu0 0
    %494 = vmatmul.mubr.bf16.gmra.mrb[0].mxu0 %v296
    %v495 = vpop.f32.mrb[0].mxu0
    %v496 = vadd.f32 %v87, %v495
    %v497 = vpop.f32.mrb[0].mxu0
    %v498 = vadd.f32 %v91, %v497
    %v499 = vpop.f32.mrb[0].mxu0
    %v500 = vadd.f32 %v87, %v499
    %v501 = vpop.f32.mrb[0].mxu0
    %v502 = vadd.f32 %v91, %v501
    %503 = vmatprep.mubr.bf16.mxu0 0
    %504 = vmatmul.mubr.bf16.gmra.mrb[0].mxu0 %v299
    %v505 = vpop.f32.mrb[0].mxu0
    %v506 = vadd.f32 %v87, %v505
    %v507 = vpop.f32.mrb[0].mxu0
    %v508 = vadd.f32 %v91, %v507
    %v509 = vpop.f32.mrb[0].mxu0
    %v510 = vadd.f32 %v87, %v509
    %v511 = vpop.f32.mrb[0].mxu0
    %v512 = vadd.f32 %v91, %v511
    %513 = vmatprep.mubr.bf16.mxu0 0
    %514 = vmatmul.mubr.bf16.gmra.mrb[0].mxu0 %v302
    %v515 = vpop.f32.mrb[0].mxu0
    %v516 = vadd.f32 %v87, %v515
    %v517 = vpop.f32.mrb[0].mxu0
    %v518 = vadd.f32 %v91, %v517
    %v519 = vpop.f32.mrb[0].mxu0
    %v520 = vadd.f32 %v87, %v519
    %v521 = vpop.f32.mrb[0].mxu0
    %v522 = vadd.f32 %v91, %v521
    %523 = vmatprep.mubr.bf16.mxu0 0
    %524 = vmatmul.mubr.bf16.gmra.mrb[0].mxu0 %v305
    %v525 = vpop.f32.mrb[0].mxu0
    %v526 = vadd.f32 %v87, %v525
    %v527 = vpop.f32.mrb[0].mxu0
    %v528 = vadd.f32 %v91, %v527
    %v529 = vpop.f32.mrb[0].mxu0
    %v530 = vadd.f32 %v87, %v529
    %v531 = vpop.f32.mrb[0].mxu0
    %v532 = vadd.f32 %v91, %v531
    %533 = vmatprep.mubr.bf16.mxu0 0
    %534 = vmatmul.mubr.bf16.gmra.mrb[0].mxu0 %v308
    %v535 = vpop.f32.mrb[0].mxu0
    %v536 = vadd.f32 %v87, %v535
    %v537 = vpop.f32.mrb[0].mxu0
    %v538 = vadd.f32 %v91, %v537
    %v539 = vpop.f32.mrb[0].mxu0
    %v540 = vadd.f32 %v87, %v539
    %v541 = vpop.f32.mrb[0].mxu0
    %v542 = vadd.f32 %v91, %v541
    %543 = vmatprep.mubr.bf16.mxu0 0
    %544 = vmatmul.mubr.bf16.gmra.mrb[0].mxu0 %v311
    %v545 = vpop.f32.mrb[0].mxu0
    %v546 = vadd.f32 %v87, %v545
    %v547 = vpop.f32.mrb[0].mxu0
    %v548 = vadd.f32 %v91, %v547
    %v549 = vpop.f32.mrb[0].mxu0
    %v550 = vadd.f32 %v87, %v549
    %v551 = vpop.f32.mrb[0].mxu0
    %v552 = vadd.f32 %v91, %v551
    %553 = vmatprep.mubr.bf16.mxu0 0
    %554 = vmatmul.mubr.bf16.gmra.mrb[0].mxu0 %v314
    %v555 = vpop.f32.mrb[0].mxu0
    %v556 = vadd.f32 %v87, %v555
    %v557 = vpop.f32.mrb[0].mxu0
    %v558 = vadd.f32 %v91, %v557
    %v559 = vpop.f32.mrb[0].mxu0
    %v560 = vadd.f32 %v87, %v559
    %v561 = vpop.f32.mrb[0].mxu0
    %v562 = vadd.f32 %v91, %v561
    %563 = vmatprep.mubr.bf16.mxu0 0
    %564 = vmatmul.mubr.bf16.gmra.mrb[0].mxu0 %v317
    %v565 = vpop.f32.mrb[0].mxu0
    %v566 = vadd.f32 %v87, %v565
    %v567 = vpop.f32.mrb[0].mxu0
    %v568 = vadd.f32 %v91, %v567
    %v569 = vpop.f32.mrb[0].mxu0
    %v570 = vadd.f32 %v87, %v569
    %v571 = vpop.f32.mrb[0].mxu0
    %v572 = vadd.f32 %v91, %v571
    %573 = vmatprep.mubr.bf16.mxu0 0
    %574 = vmatmul.mubr.bf16.gmra.mrb[0].mxu0 %v320
    %v575 = vpop.f32.mrb[0].mxu0
    %v576 = vadd.f32 %v87, %v575
    %v577 = vpop.f32.mrb[0].mxu0
    %v578 = vadd.f32 %v91, %v577
    %v579 = vpop.f32.mrb[0].mxu0
    %v580 = vadd.f32 %v87, %v579
    %v581 = vpop.f32.mrb[0].mxu0
    %v582 = vadd.f32 %v91, %v581
    %583 = vmatprep.mubr.bf16.mxu0 0
    %584 = vmatmul.mubr.bf16.gmra.mrb[0].mxu0 %v323
    %v585 = vpop.f32.mrb[0].mxu0
    %v586 = vadd.f32 %v87, %v585
    %v587 = vpop.f32.mrb[0].mxu0
    %v588 = vadd.f32 %v91, %v587
    %v589 = vpop.f32.mrb[0].mxu0
    %v590 = vadd.f32 %v87, %v589
    %v591 = vpop.f32.mrb[0].mxu0
    %v592 = vadd.f32 %v91, %v591
    %593 = vmatprep.mubr.bf16.mxu0 0
    %594 = vmatmul.mubr.bf16.gmra.mrb[0].mxu0 %v326
    %v595 = vpop.f32.mrb[0].mxu0
    %v596 = vadd.f32 %v87, %v595
    %v597 = vpop.f32.mrb[0].mxu0
    %v598 = vadd.f32 %v91, %v597
    %v599 = vpop.f32.mrb[0].mxu0
    %v600 = vadd.f32 %v87, %v599
    %v601 = vpop.f32.mrb[0].mxu0
    %v602 = vadd.f32 %v91, %v601
    %603 = vmatprep.mubr.bf16.mxu0 0
    %604 = vmatmul.mubr.bf16.gmra.mrb[0].mxu0 %v329
    %v605 = vpop.f32.mrb[0].mxu0
    %v606 = vadd.f32 %v87, %v605
    %v607 = vpop.f32.mrb[0].mxu0
    %v608 = vadd.f32 %v91, %v607
    %v609 = vpop.f32.mrb[0].mxu0
    %v610 = vadd.f32 %v87, %v609
    %v611 = vpop.f32.mrb[0].mxu0
    %v612 = vadd.f32 %v91, %v611
    %613 = vmatprep.mubr.bf16.mxu0 0
    %614 = vmatmul.mubr.bf16.gmra.mrb[0].mxu0 %v332
    %v615 = vpop.f32.mrb[0].mxu0
    %v616 = vadd.f32 %v87, %v615
    %v617 = vpop.f32.mrb[0].mxu0
    %v618 = vadd.f32 %v91, %v617
    %v619 = vpop.f32.mrb[0].mxu0
    %v620 = vadd.f32 %v87, %v619
    %v621 = vpop.f32.mrb[0].mxu0
    %v622 = vadd.f32 %v91, %v621
    %623 = vmatprep.mubr.bf16.mxu0 0
    %624 = vmatmul.mubr.bf16.gmra.mrb[0].mxu0 %v335
    %v625 = vpop.f32.mrb[0].mxu0
    %v626 = vadd.f32 %v87, %v625
    %v627 = vpop.f32.mrb[0].mxu0
    %v628 = vadd.f32 %v91, %v627
    %v629 = vpop.f32.mrb[0].mxu0
    %v630 = vadd.f32 %v87, %v629
    %v631 = vpop.f32.mrb[0].mxu0
    %v632 = vadd.f32 %v91, %v631
    %633 = vmatprep.mubr.bf16.mxu0 0
    %634 = vmatmul.mubr.bf16.gmra.mrb[0].mxu0 %v338
    %v635 = vpop.f32.mrb[0].mxu0
    %v636 = vadd.f32 %v87, %v635
    %v637 = vpop.f32.mrb[0].mxu0
    %v638 = vadd.f32 %v91, %v637
    %v639 = vpop.f32.mrb[0].mxu0
    %v640 = vadd.f32 %v87, %v639
    %v641 = vpop.f32.mrb[0].mxu0
    %v642 = vadd.f32 %v91, %v641
    %643 = vmatprep.mubr.bf16.mxu0 0
    %644 = vmatmul.mubr.bf16.gmra.mrb[0].mxu0 %v341
    %v645 = vpop.f32.mrb[0].mxu0
    %v646 = vadd.f32 %v87, %v645
    %v647 = vpop.f32.mrb[0].mxu0
    %v648 = vadd.f32 %v91, %v647
    %v649 = vpop.f32.mrb[0].mxu0
    %v650 = vadd.f32 %v87, %v649
    %v651 = vpop.f32.mrb[0].mxu0
    %v652 = vadd.f32 %v91, %v651
    %653 = vmatprep.mubr.bf16.mxu0 0
    %654 = vmatmul.mubr.bf16.gmra.mrb[0].mxu0 %v344
    %v655 = vpop.f32.mrb[0].mxu0
    %v656 = vadd.f32 %v87, %v655
    %v657 = vpop.f32.mrb[0].mxu0
    %v658 = vadd.f32 %v91, %v657
    %v659 = vpop.f32.mrb[0].mxu0
    %v660 = vadd.f32 %v87, %v659
    %v661 = vpop.f32.mrb[0].mxu0
    %v662 = vadd.f32 %v91, %v661
    %663 = vmatprep.mubr.bf16.mxu0 0
    %664 = vmatmul.mubr.bf16.gmra.mrb[0].mxu0 %v347
    %v665 = vpop.f32.mrb[0].mxu0
    %v666 = vadd.f32 %v87, %v665
    %v667 = vpop.f32.mrb[0].mxu0
    %v668 = vadd.f32 %v91, %v667
    %v669 = vpop.f32.mrb[0].mxu0
    %v670 = vadd.f32 %v87, %v669
    %v671 = vpop.f32.mrb[0].mxu0
    %v672 = vadd.f32 %v91, %v671
    %673 = vmatprep.mubr.bf16.mxu0 0
    %674 = vmatmul.mubr.bf16.gmra.mrb[0].mxu0 %v350
    %v675 = vpop.f32.mrb[0].mxu0
    %v676 = vadd.f32 %v87, %v675
    %v677 = vpop.f32.mrb[0].mxu0
    %v678 = vadd.f32 %v91, %v677
    %v679 = vpop.f32.mrb[0].mxu0
    %v680 = vadd.f32 %v87, %v679
    %v681 = vpop.f32.mrb[0].mxu0
    %v682 = vadd.f32 %v91, %v681
    %683 = vmatprep.mubr.bf16.mxu0 0
    %684 = vmatmul.mubr.bf16.gmra.mrb[0].mxu0 %v353
    %v685 = vpop.f32.mrb[0].mxu0
    %v686 = vadd.f32 %v87, %v685
    %v687 = vpop.f32.mrb[0].mxu0
    %v688 = vadd.f32 %v91, %v687
    %v689 = vpop.f32.mrb[0].mxu0
    %v690 = vadd.f32 %v87, %v689
    %v691 = vpop.f32.mrb[0].mxu0
    %v692 = vadd.f32 %v91, %v691
    %693 = vmatprep.mubr.bf16.mxu0 0
    %694 = vmatmul.mubr.bf16.gmra.mrb[0].mxu0 %v356
    %v695 = vpop.f32.mrb[0].mxu0
    %v696 = vadd.f32 %v87, %v695
    %v697 = vpop.f32.mrb[0].mxu0
    %v698 = vadd.f32 %v91, %v697
    %v699 = vpop.f32.mrb[0].mxu0
    %v700 = vadd.f32 %v87, %v699
    %v701 = vpop.f32.mrb[0].mxu0
    %v702 = vadd.f32 %v91, %v701
    %703 = vmatprep.mubr.bf16.mxu0 0
    %704 = vmatmul.mubr.bf16.gmra.mrb[0].mxu0 %v359
    %v705 = vpop.f32.mrb[0].mxu0
    %v706 = vadd.f32 %v87, %v705
    %v707 = vpop.f32.mrb[0].mxu0
    %v708 = vadd.f32 %v91, %v707
    %v709 = vpop.f32.mrb[0].mxu0
    %v710 = vadd.f32 %v87, %v709
    %v711 = vpop.f32.mrb[0].mxu0
    %v712 = vadd.f32 %v91, %v711
    %713 = vdwg.mxu0
    %v714 = vpack.c.bf16 %v400, %v396
    %v715 = vpack.c.bf16 %v402, %v398
    %v716 = vpack.c.bf16 %v410, %v406
    %v717 = vpack.c.bf16 %v412, %v408
    %v718 = vpack.c.bf16 %v420, %v416
    %v719 = vpack.c.bf16 %v422, %v418
    %v720 = vpack.c.bf16 %v430, %v426
    %v721 = vpack.c.bf16 %v432, %v428
    %v722 = vpack.c.bf16 %v440, %v436
    %v723 = vpack.c.bf16 %v442, %v438
    %v724 = vpack.c.bf16 %v450, %v446
    %v725 = vpack.c.bf16 %v452, %v448
    %v726 = vpack.c.bf16 %v460, %v456
    %v727 = vpack.c.bf16 %v462, %v458
    %v728 = vpack.c.bf16 %v470, %v466
    %v729 = vpack.c.bf16 %v472, %v468
    %v730 = vpack.c.bf16 %v480, %v476
    %v731 = vpack.c.bf16 %v482, %v478
    %v732 = vpack.c.bf16 %v490, %v486
    %v733 = vpack.c.bf16 %v492, %v488
    %v734 = vpack.c.bf16 %v500, %v496
    %v735 = vpack.c.bf16 %v502, %v498
    %v736 = vpack.c.bf16 %v510, %v506
    %v737 = vpack.c.bf16 %v512, %v508
    %v738 = vpack.c.bf16 %v520, %v516
    %v739 = vpack.c.bf16 %v522, %v518
    %v740 = vpack.c.bf16 %v530, %v526
    %v741 = vpack.c.bf16 %v532, %v528
    %v742 = vpack.c.bf16 %v540, %v536
    %v743 = vpack.c.bf16 %v542, %v538
    %v744 = vpack.c.bf16 %v550, %v546
    %v745 = vpack.c.bf16 %v552, %v548
    %v746 = vpack.c.bf16 %v560, %v556
    %v747 = vpack.c.bf16 %v562, %v558
    %v748 = vpack.c.bf16 %v570, %v566
    %v749 = vpack.c.bf16 %v572, %v568
    %v750 = vpack.c.bf16 %v580, %v576
    %v751 = vpack.c.bf16 %v582, %v578
    %v752 = vpack.c.bf16 %v590, %v586
    %v753 = vpack.c.bf16 %v592, %v588
    %v754 = vpack.c.bf16 %v600, %v596
    %v755 = vpack.c.bf16 %v602, %v598
    %v756 = vpack.c.bf16 %v610, %v606
    %v757 = vpack.c.bf16 %v612, %v608
    %v758 = vpack.c.bf16 %v620, %v616
    %v759 = vpack.c.bf16 %v622, %v618
    %v760 = vpack.c.bf16 %v630, %v626
    %v761 = vpack.c.bf16 %v632, %v628
    %v762 = vpack.c.bf16 %v640, %v636
    %v763 = vpack.c.bf16 %v642, %v638
    %v764 = vpack.c.bf16 %v650, %v646
    %v765 = vpack.c.bf16 %v652, %v648
    %v766 = vpack.c.bf16 %v660, %v656
    %v767 = vpack.c.bf16 %v662, %v658
    %v768 = vpack.c.bf16 %v670, %v666
    %v769 = vpack.c.bf16 %v672, %v668
    %v770 = vpack.c.bf16 %v680, %v676
    %v771 = vpack.c.bf16 %v682, %v678
    %v772 = vpack.c.bf16 %v690, %v686
    %v773 = vpack.c.bf16 %v692, %v688
    %v774 = vpack.c.bf16 %v700, %v696
    %v775 = vpack.c.bf16 %v702, %v698
    %v776 = vpack.c.bf16 %v710, %v706
    %v777 = vpack.c.bf16 %v712, %v708
    %v842 = vunpack.c.l.b16 %v714
    %v843 = vunpack.c.l.b16 %v715
    %v844 = vunpack.c.h.b16 %v714
    %v845 = vunpack.c.h.b16 %v715
    %v846 = vunpack.c.l.b16 %v716
    %v847 = vunpack.c.l.b16 %v717
    %v848 = vunpack.c.h.b16 %v716
    %v849 = vunpack.c.h.b16 %v717
    %v850 = vunpack.c.l.b16 %v718
    %v851 = vunpack.c.l.b16 %v719
    %v852 = vunpack.c.h.b16 %v718
    %v853 = vunpack.c.h.b16 %v719
    %v854 = vunpack.c.l.b16 %v720
    %v855 = vunpack.c.l.b16 %v721
    %v856 = vunpack.c.h.b16 %v720
    %v857 = vunpack.c.h.b16 %v721
    %v858 = vunpack.c.l.b16 %v722
    %v859 = vunpack.c.l.b16 %v723
    %v860 = vunpack.c.h.b16 %v722
    %v861 = vunpack.c.h.b16 %v723
    %v862 = vunpack.c.l.b16 %v724
    %v863 = vunpack.c.l.b16 %v725
    %v864 = vunpack.c.h.b16 %v724
    %v865 = vunpack.c.h.b16 %v725
    %v866 = vunpack.c.l.b16 %v726
    %v867 = vunpack.c.l.b16 %v727
    %v868 = vunpack.c.h.b16 %v726
    %v869 = vunpack.c.h.b16 %v727
    %v870 = vunpack.c.l.b16 %v728
    %v871 = vunpack.c.l.b16 %v729
    %v872 = vunpack.c.h.b16 %v728
    %v873 = vunpack.c.h.b16 %v729
    %v874 = vunpack.c.l.b16 %v730
    %v875 = vunpack.c.l.b16 %v731
    %v876 = vunpack.c.h.b16 %v730
    %v877 = vunpack.c.h.b16 %v731
    %v878 = vunpack.c.l.b16 %v732
    %v879 = vunpack.c.l.b16 %v733
    %v880 = vunpack.c.h.b16 %v732
    %v881 = vunpack.c.h.b16 %v733
    %v882 = vunpack.c.l.b16 %v734
    %v883 = vunpack.c.l.b16 %v735
    %v884 = vunpack.c.h.b16 %v734
    %v885 = vunpack.c.h.b16 %v735
    %v886 = vunpack.c.l.b16 %v736
    %v887 = vunpack.c.l.b16 %v737
    %v888 = vunpack.c.h.b16 %v736
    %v889 = vunpack.c.h.b16 %v737
    %v890 = vunpack.c.l.b16 %v738
    %v891 = vunpack.c.l.b16 %v739
    %v892 = vunpack.c.h.b16 %v738
    %v893 = vunpack.c.h.b16 %v739
    %v894 = vunpack.c.l.b16 %v740
    %v895 = vunpack.c.l.b16 %v741
    %v896 = vunpack.c.h.b16 %v740
    %v897 = vunpack.c.h.b16 %v741
    %v898 = vunpack.c.l.b16 %v742
    %v899 = vunpack.c.l.b16 %v743
    %v900 = vunpack.c.h.b16 %v742
    %v901 = vunpack.c.h.b16 %v743
    %v902 = vunpack.c.l.b16 %v744
    %v903 = vunpack.c.l.b16 %v745
    %v904 = vunpack.c.h.b16 %v744
    %v905 = vunpack.c.h.b16 %v745
    %v906 = vunpack.c.l.b16 %v746
    %v907 = vunpack.c.l.b16 %v747
    %v908 = vunpack.c.h.b16 %v746
    %v909 = vunpack.c.h.b16 %v747
    %v910 = vunpack.c.l.b16 %v748
    %v911 = vunpack.c.l.b16 %v749
    %v912 = vunpack.c.h.b16 %v748
    %v913 = vunpack.c.h.b16 %v749
    %v914 = vunpack.c.l.b16 %v750
    %v915 = vunpack.c.l.b16 %v751
    %v916 = vunpack.c.h.b16 %v750
    %v917 = vunpack.c.h.b16 %v751
    %v918 = vunpack.c.l.b16 %v752
    %v919 = vunpack.c.l.b16 %v753
    %v920 = vunpack.c.h.b16 %v752
    %v921 = vunpack.c.h.b16 %v753
    %v922 = vunpack.c.l.b16 %v754
    %v923 = vunpack.c.l.b16 %v755
    %v924 = vunpack.c.h.b16 %v754
    %v925 = vunpack.c.h.b16 %v755
    %v926 = vunpack.c.l.b16 %v756
    %v927 = vunpack.c.l.b16 %v757
    %v928 = vunpack.c.h.b16 %v756
    %v929 = vunpack.c.h.b16 %v757
    %v930 = vunpack.c.l.b16 %v758
    %v931 = vunpack.c.l.b16 %v759
    %v932 = vunpack.c.h.b16 %v758
    %v933 = vunpack.c.h.b16 %v759
    %v934 = vunpack.c.l.b16 %v760
    %v935 = vunpack.c.l.b16 %v761
    %v936 = vunpack.c.h.b16 %v760
    %v937 = vunpack.c.h.b16 %v761
    %v938 = vunpack.c.l.b16 %v762
    %v939 = vunpack.c.l.b16 %v763
    %v940 = vunpack.c.h.b16 %v762
    %v941 = vunpack.c.h.b16 %v763
    %v942 = vunpack.c.l.b16 %v764
    %v943 = vunpack.c.l.b16 %v765
    %v944 = vunpack.c.h.b16 %v764
    %v945 = vunpack.c.h.b16 %v765
    %v946 = vunpack.c.l.b16 %v766
    %v947 = vunpack.c.l.b16 %v767
    %v948 = vunpack.c.h.b16 %v766
    %v949 = vunpack.c.h.b16 %v767
    %v950 = vunpack.c.l.b16 %v768
    %v951 = vunpack.c.l.b16 %v769
    %v952 = vunpack.c.h.b16 %v768
    %v953 = vunpack.c.h.b16 %v769
    %v954 = vunpack.c.l.b16 %v770
    %v955 = vunpack.c.l.b16 %v771
    %v956 = vunpack.c.h.b16 %v770
    %v957 = vunpack.c.h.b16 %v771
    %v958 = vunpack.c.l.b16 %v772
    %v959 = vunpack.c.l.b16 %v773
    %v960 = vunpack.c.h.b16 %v772
    %v961 = vunpack.c.h.b16 %v773
    %v962 = vunpack.c.l.b16 %v774
    %v963 = vunpack.c.l.b16 %v775
    %v964 = vunpack.c.h.b16 %v774
    %v965 = vunpack.c.h.b16 %v775
    %v966 = vunpack.c.l.b16 %v776
    %v967 = vunpack.c.l.b16 %v777
    %v968 = vunpack.c.h.b16 %v776
    %v969 = vunpack.c.h.b16 %v777
    %v970 = vpack.c.b16 %v843, %v842
    %v971 = vpack.c.b16 %v845, %v844
    %v972 = vpack.c.b16 %v847, %v846
    %v973 = vpack.c.b16 %v849, %v848
    %v974 = vpack.c.b16 %v851, %v850
    %v975 = vpack.c.b16 %v853, %v852
    %v976 = vpack.c.b16 %v855, %v854
    %v977 = vpack.c.b16 %v857, %v856
    %v978 = vpack.c.b16 %v859, %v858
    %v979 = vpack.c.b16 %v861, %v860
    %v980 = vpack.c.b16 %v863, %v862
    %v981 = vpack.c.b16 %v865, %v864
    %v982 = vpack.c.b16 %v867, %v866
    %v983 = vpack.c.b16 %v869, %v868
    %v984 = vpack.c.b16 %v871, %v870
    %v985 = vpack.c.b16 %v873, %v872
    %v986 = vpack.c.b16 %v875, %v874
    %v987 = vpack.c.b16 %v877, %v876
    %v988 = vpack.c.b16 %v879, %v878
    %v989 = vpack.c.b16 %v881, %v880
    %v990 = vpack.c.b16 %v883, %v882
    %v991 = vpack.c.b16 %v885, %v884
    %v992 = vpack.c.b16 %v887, %v886
    %v993 = vpack.c.b16 %v889, %v888
    %v994 = vpack.c.b16 %v891, %v890
    %v995 = vpack.c.b16 %v893, %v892
    %v996 = vpack.c.b16 %v895, %v894
    %v997 = vpack.c.b16 %v897, %v896
    %v998 = vpack.c.b16 %v899, %v898
    %v999 = vpack.c.b16 %v901, %v900
    %v1000 = vpack.c.b16 %v903, %v902
    %v1001 = vpack.c.b16 %v905, %v904
    %v1002 = vpack.c.b16 %v907, %v906
    %v1003 = vpack.c.b16 %v909, %v908
    %v1004 = vpack.c.b16 %v911, %v910
    %v1005 = vpack.c.b16 %v913, %v912
    %v1006 = vpack.c.b16 %v915, %v914
    %v1007 = vpack.c.b16 %v917, %v916
    %v1008 = vpack.c.b16 %v919, %v918
    %v1009 = vpack.c.b16 %v921, %v920
    %v1010 = vpack.c.b16 %v923, %v922
    %v1011 = vpack.c.b16 %v925, %v924
    %v1012 = vpack.c.b16 %v927, %v926
    %v1013 = vpack.c.b16 %v929, %v928
    %v1014 = vpack.c.b16 %v931, %v930
    %v1015 = vpack.c.b16 %v933, %v932
    %v1016 = vpack.c.b16 %v935, %v934
    %v1017 = vpack.c.b16 %v937, %v936
    %v1018 = vpack.c.b16 %v939, %v938
    %v1019 = vpack.c.b16 %v941, %v940
    %v1020 = vpack.c.b16 %v943, %v942
    %v1021 = vpack.c.b16 %v945, %v944
    %v1022 = vpack.c.b16 %v947, %v946
    %v1023 = vpack.c.b16 %v949, %v948
    %v1024 = vpack.c.b16 %v951, %v950
    %v1025 = vpack.c.b16 %v953, %v952
    %v1026 = vpack.c.b16 %v955, %v954
    %v1027 = vpack.c.b16 %v957, %v956
    %v1028 = vpack.c.b16 %v959, %v958
    %v1029 = vpack.c.b16 %v961, %v960
    %v1030 = vpack.c.b16 %v963, %v962
    %v1031 = vpack.c.b16 %v965, %v964
    %v1032 = vpack.c.b16 %v967, %v966
    %v1033 = vpack.c.b16 %v969, %v968
    %1098 = vst [vmem:[#allocation2] sm:$0xff] %v970
    %1099 = vst [vmem:[#allocation2 + $0x8] sm:$0xff] %v971
    %1100 = vst [vmem:[#allocation2 + $0x10] sm:$0xff] %v972
    %1101 = vst [vmem:[#allocation2 + $0x18] sm:$0xff] %v973
    %1102 = vst [vmem:[#allocation2 + $0x20] sm:$0xff] %v974
    %1103 = vst [vmem:[#allocation2 + $0x28] sm:$0xff] %v975
    %1104 = vst [vmem:[#allocation2 + $0x30] sm:$0xff] %v976
    %1105 = vst [vmem:[#allocation2 + $0x38] sm:$0xff] %v977
    %1106 = vst [vmem:[#allocation2 + $0x40] sm:$0xff] %v978
    %1107 = vst [vmem:[#allocation2 + $0x48] sm:$0xff] %v979
    %1108 = vst [vmem:[#allocation2 + $0x50] sm:$0xff] %v980
    %1109 = vst [vmem:[#allocation2 + $0x58] sm:$0xff] %v981
    %1110 = vst [vmem:[#allocation2 + $0x60] sm:$0xff] %v982
    %1111 = vst [vmem:[#allocation2 + $0x68] sm:$0xff] %v983
    %1112 = vst [vmem:[#allocation2 + $0x70] sm:$0xff] %v984
    %1113 = vst [vmem:[#allocation2 + $0x78] sm:$0xff] %v985
    %1114 = vst [vmem:[#allocation2 + $0x80] sm:$0xff] %v986
    %1115 = vst [vmem:[#allocation2 + $0x88] sm:$0xff] %v987
    %1116 = vst [vmem:[#allocation2 + $0x90] sm:$0xff] %v988
    %1117 = vst [vmem:[#allocation2 + $0x98] sm:$0xff] %v989
    %1118 = vst [vmem:[#allocation2 + $0xa0] sm:$0xff] %v990
    %1119 = vst [vmem:[#allocation2 + $0xa8] sm:$0xff] %v991
    %1120 = vst [vmem:[#allocation2 + $0xb0] sm:$0xff] %v992
    %1121 = vst [vmem:[#allocation2 + $0xb8] sm:$0xff] %v993
    %1122 = vst [vmem:[#allocation2 + $0xc0] sm:$0xff] %v994
    %1123 = vst [vmem:[#allocation2 + $0xc8] sm:$0xff] %v995
    %1124 = vst [vmem:[#allocation2 + $0xd0] sm:$0xff] %v996
    %1125 = vst [vmem:[#allocation2 + $0xd8] sm:$0xff] %v997
    %1126 = vst [vmem:[#allocation2 + $0xe0] sm:$0xff] %v998
    %1127 = vst [vmem:[#allocation2 + $0xe8] sm:$0xff] %v999
    %1128 = vst [vmem:[#allocation2 + $0xf0] sm:$0xff] %v1000
    %1129 = vst [vmem:[#allocation2 + $0xf8] sm:$0xff] %v1001
    %1130 = vst [vmem:[#allocation2 + $0x100] sm:$0xff] %v1002
    %1131 = vst [vmem:[#allocation2 + $0x108] sm:$0xff] %v1003
    %1132 = vst [vmem:[#allocation2 + $0x110] sm:$0xff] %v1004
    %1133 = vst [vmem:[#allocation2 + $0x118] sm:$0xff] %v1005
    %1134 = vst [vmem:[#allocation2 + $0x120] sm:$0xff] %v1006
    %1135 = vst [vmem:[#allocation2 + $0x128] sm:$0xff] %v1007
    %1136 = vst [vmem:[#allocation2 + $0x130] sm:$0xff] %v1008
    %1137 = vst [vmem:[#allocation2 + $0x138] sm:$0xff] %v1009
    %1138 = vst [vmem:[#allocation2 + $0x140] sm:$0xff] %v1010
    %1139 = vst [vmem:[#allocation2 + $0x148] sm:$0xff] %v1011
    %1140 = vst [vmem:[#allocation2 + $0x150] sm:$0xff] %v1012
    %1141 = vst [vmem:[#allocation2 + $0x158] sm:$0xff] %v1013
    %1142 = vst [vmem:[#allocation2 + $0x160] sm:$0xff] %v1014
    %1143 = vst [vmem:[#allocation2 + $0x168] sm:$0xff] %v1015
    %1144 = vst [vmem:[#allocation2 + $0x170] sm:$0xff] %v1016
    %1145 = vst [vmem:[#allocation2 + $0x178] sm:$0xff] %v1017
    %1146 = vst [vmem:[#allocation2 + $0x180] sm:$0xff] %v1018
    %1147 = vst [vmem:[#allocation2 + $0x188] sm:$0xff] %v1019
    %1148 = vst [vmem:[#allocation2 + $0x190] sm:$0xff] %v1020
    %1149 = vst [vmem:[#allocation2 + $0x198] sm:$0xff] %v1021
    %1150 = vst [vmem:[#allocation2 + $0x1a0] sm:$0xff] %v1022
    %1151 = vst [vmem:[#allocation2 + $0x1a8] sm:$0xff] %v1023
    %1152 = vst [vmem:[#allocation2 + $0x1b0] sm:$0xff] %v1024
    %1153 = vst [vmem:[#allocation2 + $0x1b8] sm:$0xff] %v1025
    %1154 = vst [vmem:[#allocation2 + $0x1c0] sm:$0xff] %v1026
    %1155 = vst [vmem:[#allocation2 + $0x1c8] sm:$0xff] %v1027
    %1156 = vst [vmem:[#allocation2 + $0x1d0] sm:$0xff] %v1028
    %1157 = vst [vmem:[#allocation2 + $0x1d8] sm:$0xff] %v1029
    %1158 = vst [vmem:[#allocation2 + $0x1e0] sm:$0xff] %v1030
    %1159 = vst [vmem:[#allocation2 + $0x1e8] sm:$0xff] %v1031
    %1160 = vst [vmem:[#allocation2 + $0x1f0] sm:$0xff] %v1032
    %1161 = vst [vmem:[#allocation2 + $0x1f8] sm:$0xff] %v1033
    // Predicated region
    $region14: #{tpu_custom_call.1} parent=1 // pred_check
      _
    $region15: #{tpu_custom_call.1} parent=1 // pred_check_branch
      %1163 = sbr.rel (0) target = $region17
    $region16: #{tpu_custom_call.1} parent=1 // pred_region
      %s1165 = ssub.s32 8192, 8192
      %1166 = vsyncadd [#allocation3], %s1165
      %s1167 = sshll.u32 [#allocation2], 4
      %s1168 = int_to_ptr.vmem [resolvable:$true] %s1167
      %1173 = dma.vmem_to_hbm [thread:$0]  %s1168, 8192, %s3, [#allocation3], 128, 128, 8
    $region17: #{tpu_custom_call.1} parent=1 // pred_fallthru
      _
    // Predicated region
    $region18: #{tpu_custom_call.1} parent=1 // pred_check
      _
    $region19: #{tpu_custom_call.1} parent=1 // pred_check_branch
      %1175 = sbr.rel (0) target = $region21
    $region20: #{tpu_custom_call.1} parent=1 // pred_region
      %1176 = dma.done [#allocation3], 8192
    $region21: #{tpu_custom_call.1} parent=1 // pred_fallthru
      _
    %1177 = vsyncpa [#allocation3], 1

</llo_original>
